<compile_context>
chip_gen: v6e
topology: v6e:2x2x1
jax: 0.10.0
libtpu: 0.0.40
codegen_flags: <defaults>
</compile_context>

<pallas_src>
import jax
import jax.numpy as jnp
from jax.experimental import pallas as pl
from jax.experimental.pallas import tpu as pltpu

# ---- model hyper-parameters (small, synthetic) ------------------------------
NUM_PIXELS = 64
NUM_HIDDEN1 = 128
NUM_HIDDEN2 = 64
NUM_STYLE = 8
NUM_DIGITS = 10
NUM_SAMPLES = 2
BATCH = 4
DIGIT_TEMP = 0.66

DIGITS_PAD = 16            # digit lanes padded 10 -> 16
NEG_BIG = -1e30            # softmax "-inf" for padded digit lanes (applied post-scale)

# ---- bf16 weight-slab row offsets ([R_TOTAL, 128]) ---------------------------
R_W1 = 0                                   # [64, 128]   enc_hidden W
R_WD = R_W1 + NUM_PIXELS                   # [128, 128]  digit_log_weights W (cols 0:10)
R_W1H = R_WD + NUM_HIDDEN1                 # [128, 128]  [wm1h | ws1h]
R_W1D = R_W1H + NUM_HIDDEN1                # [16, 128]   [wm1d | ws1d] (rows 0:10)
R_W2 = R_W1D + DIGITS_PAD                  # [128, 128]  block-diag(wm2, ws2) in cols 0:16
R_TOTAL = R_W2 + 2 * NUM_HIDDEN2           # 464 (multiple of 16 -> aligned bf16 slices)

OUT_W = DIGITS_PAD + 3 * NUM_STYLE         # 40 output lanes: digits16 | mean | std | z

ROW_BLOCK = 256                            # rows per grid step for large-N calls


# ---- Pallas kernel -----------------------------------------------------------
def encoder_kernel(x_ref, g_ref, eps_ref, w_ref, b_ref, out_ref):
    f32 = jnp.float32
    n = x_ref.shape[0]

    x = x_ref[...]                                            # [n, 64]  f32
    g10 = g_ref[...]                                          # [n, 10]  f32
    eps = eps_ref[...]                                        # [n, 8]   f32

    # bf16-stored weights, up-cast in vregs (DMA is bf16; matmuls stay f32).
    w1 = w_ref[R_W1:R_W1 + NUM_PIXELS, :].astype(f32)         # [64, 128]
    wd = w_ref[R_WD:R_WD + NUM_HIDDEN1, :].astype(f32)        # [128,128] cols>=10 == 0
    w1h = w_ref[R_W1H:R_W1H + NUM_HIDDEN1, :].astype(f32)     # [128,128] [wm1h|ws1h]
    w1d = w_ref[R_W1D:R_W1D + DIGITS_PAD, :].astype(f32)      # [16, 128] rows>=10 == 0
    w2 = w_ref[R_W2:R_W2 + 2 * NUM_HIDDEN2, :].astype(f32)    # [128,128] cols>=16 == 0

    b1 = b_ref[0:1, :]                                        # [1,128]
    bd = b_ref[1:2, :]                                        # [1,128] cols>=10 == 0
    bcat = b_ref[2:3, :]                                      # [1,128] [bm1 | bs1]
    b2 = b_ref[3:4, :]                                        # [1,128] cols>=16 == 0

    # hidden = ReLU(x @ W1 + b1)
    hidden = jnp.maximum(
        jnp.dot(x, w1, preferred_element_type=f32) + b1, 0.0)            # [n, 128]

    # Digit logits: full-width matmul (no lane-partial weight load), slice result.
    logits = jnp.dot(hidden, wd, preferred_element_type=f32) + bd        # [n, 128]
    logits16 = logits[:, :DIGITS_PAD]                                    # [n, 16]

    # Relaxed (concrete / Gumbel-softmax) sample in a 16-lane padded space.
    # Gumbel widened 10 -> 16 in-kernel; mask applied AFTER the temperature scale
    # so pad correctness does not depend on packing and never nears f32 max.
    g16 = jnp.concatenate(
        [g10, jnp.zeros((n, DIGITS_PAD - NUM_DIGITS), f32)], axis=-1)    # [n, 16]
    lane = jax.lax.broadcasted_iota(jnp.int32, (n, DIGITS_PAD), 1)
    y = (logits16 + g16) * (1.0 / DIGIT_TEMP)
    y = jnp.where(lane < NUM_DIGITS, y, NEG_BIG)
    y = y - jnp.max(y, axis=-1, keepdims=True)
    e = jnp.exp(y)
    digits16 = e / jnp.sum(e, axis=-1, keepdims=True)   # exact division (feeds log-probs)

    # hidden2 = cat([digits, hidden], -1); both branch-1 Linears fused into one pair
    # of matmuls producing the full 128-lane intermediate [h2_mean | h2_std].
    h2 = jnp.maximum(
        jnp.dot(digits16, w1d, preferred_element_type=f32)
        + jnp.dot(hidden, w1h, preferred_element_type=f32)
        + bcat, 0.0)                                                     # [n, 128]

    # Fused second layer: block-diagonal full-width weight -> [mean | log_std].
    ms = jnp.dot(h2, w2, preferred_element_type=f32) + b2                # [n, 128]
    mean = ms[:, :NUM_STYLE]
    std = jnp.exp(ms[:, NUM_STYLE:2 * NUM_STYLE])
    z = mean + std * eps                                 # reparameterized N(mean, std)

    # Direct lane-range stores (no cross-lane concat shuffle).
    out_ref[:, 0:DIGITS_PAD] = digits16
    out_ref[:, DIGITS_PAD:DIGITS_PAD + NUM_STYLE] = mean
    out_ref[:, DIGITS_PAD + NUM_STYLE:DIGITS_PAD + 2 * NUM_STYLE] = std
    out_ref[:, DIGITS_PAD + 2 * NUM_STYLE:DIGITS_PAD + 3 * NUM_STYLE] = z


# ---- parameter setup ---------------------------------------------------------
def init_linear(key, in_f, out_f):
    """PyTorch-style uniform(-1/sqrt(fan_in), 1/sqrt(fan_in)); (W[in,out], b[1,out])."""
    kw, kb = jax.random.split(key)
    bound = 1.0 / jnp.sqrt(in_f)
    w = jax.random.uniform(kw, (in_f, out_f), jnp.float32, -bound, bound)
    b = jax.random.uniform(kb, (1, out_f), jnp.float32, -bound, bound)
    return w, b


def make_params(key):
    ks = jax.random.split(key, 6)
    w1, b1 = init_linear(ks[0], NUM_PIXELS, NUM_HIDDEN1)
    wd, bd = init_linear(ks[1], NUM_HIDDEN1, NUM_DIGITS)
    wm1, bm1 = init_linear(ks[2], NUM_HIDDEN1 + NUM_DIGITS, NUM_HIDDEN2)
    wm2, bm2 = init_linear(ks[3], NUM_HIDDEN2, NUM_STYLE)
    ws1, bs1 = init_linear(ks[4], NUM_HIDDEN1 + NUM_DIGITS, NUM_HIDDEN2)
    ws2, bs2 = init_linear(ks[5], NUM_HIDDEN2, NUM_STYLE)
    # cat order is [digits, hidden] -> first NUM_DIGITS rows are the digits part
    return dict(
        w1=w1, b1=b1, wd=wd, bd=bd,
        wm1d=wm1[:NUM_DIGITS], wm1h=wm1[NUM_DIGITS:], bm1=bm1, wm2=wm2, bm2=bm2,
        ws1d=ws1[:NUM_DIGITS], ws1h=ws1[NUM_DIGITS:], bs1=bs1, ws2=ws2, bs2=bs2,
    )


def pack_weights(p):
    """Pack all weights into one zero-padded [R_TOTAL, 128] bf16 slab (single DMA)."""
    H1, H2, D, ST = NUM_HIDDEN1, NUM_HIDDEN2, NUM_DIGITS, NUM_STYLE
    wd_pad = jnp.zeros((H1, 128), jnp.float32).at[:, :D].set(p["wd"])
    w1h = jnp.concatenate([p["wm1h"], p["ws1h"]], axis=1)                # [128, 128]
    w1d = jnp.concatenate([p["wm1d"], p["ws1d"]], axis=1)                # [10, 128]
    w1d_pad = jnp.zeros((DIGITS_PAD, 128), jnp.float32).at[:D, :].set(w1d)
    w2_pad = (jnp.zeros((2 * H2, 128), jnp.float32)
              .at[:H2, :ST].set(p["wm2"])
              .at[H2:, ST:2 * ST].set(p["ws2"]))                         # block diagonal
    slab = jnp.concatenate([p["w1"], wd_pad, w1h, w1d_pad, w2_pad], axis=0)
    assert slab.shape == (R_TOTAL, 128)
    return slab.astype(jnp.bfloat16)


def pack_bias(p):
    """Biases stay f32: tiny [4,128] slab, exact (no quantization error)."""
    D, ST = NUM_DIGITS, NUM_STYLE
    bd = jnp.zeros((1, 128), jnp.float32).at[:, :D].set(p["bd"])
    bcat = jnp.concatenate([p["bm1"], p["bs1"]], axis=1)                 # [1, 128]
    b2 = (jnp.zeros((1, 128), jnp.float32)
          .at[:, :ST].set(p["bm2"])
          .at[:, ST:2 * ST].set(p["bs2"]))
    return jnp.concatenate([p["b1"], bd, bcat, b2], axis=0)              # [4, 128]


# ---- wrapper -----------------------------------------------------------------
def _round_up(a, b):
    return (a + b - 1) // b * b


@jax.jit
def encoder_forward(images, gumbel, eps, w_slab, bias):
    """images: [S, B, P]; returns digits, styles_mean, styles_std, z."""
    S, B, P = images.shape
    N = S * B
    x = images.reshape(N, P)
    g = gumbel.reshape(N, NUM_DIGITS)
    e = eps.reshape(N, NUM_STYLE)

    # Row tile: one block at small N; ROW_BLOCK-row blocks (parallel grid) at large N.
    tb = min(ROW_BLOCK, _round_up(N, 8))
    npad = _round_up(N, tb)
    if npad != N:
        x = jnp.zeros((npad, P), x.dtype).at[:N].set(x)
        g = jnp.zeros((npad, NUM_DIGITS), g.dtype).at[:N].set(g)
        e = jnp.zeros((npad, NUM_STYLE), e.dtype).at[:N].set(e)

    out = pl.pallas_call(
        encoder_kernel,
        out_shape=jax.ShapeDtypeStruct((npad, OUT_W), jnp.float32),
        grid=(npad // tb,),
        in_specs=[
            pl.BlockSpec((tb, NUM_PIXELS), lambda i: (i, 0)),
            pl.BlockSpec((tb, NUM_DIGITS), lambda i: (i, 0)),
            pl.BlockSpec((tb, NUM_STYLE), lambda i: (i, 0)),
            # Constant index_map: weights/biases DMA'd once, resident across grid steps.
            pl.BlockSpec((R_TOTAL, 128), lambda i: (0, 0)),
            pl.BlockSpec((4, 128), lambda i: (0, 0)),
        ],
        out_specs=pl.BlockSpec((tb, OUT_W), lambda i: (i, 0)),
        compiler_params=pltpu.CompilerParams(
            dimension_semantics=("parallel",)),
    )(x, g, e, w_slab, bias)

    digits = out[:N, :NUM_DIGITS]
    mean = out[:N, DIGITS_PAD:DIGITS_PAD + NUM_STYLE]
    std = out[:N, DIGITS_PAD + NUM_STYLE:DIGITS_PAD + 2 * NUM_STYLE]
    z = out[:N, DIGITS_PAD + 2 * NUM_STYLE:DIGITS_PAD + 3 * NUM_STYLE]
    return (digits.reshape(S, B, NUM_DIGITS),
            mean.reshape(S, B, NUM_STYLE),
            std.reshape(S, B, NUM_STYLE),
            z.reshape(S, B, NUM_STYLE))


# ---- pure-JAX reference for verification -------------------------------------
def reference_forward(images, gumbel, eps, p):
    # Weights quantized the same way the kernel stores them (bf16 round-trip);
    # biases and all activations/VPU math stay f32, as in the kernel.
    q = lambda w: w.astype(jnp.bfloat16).astype(jnp.float32)
    hidden = jax.nn.relu(images @ q(p["w1"]) + p["b1"][0])
    logits = hidden @ q(p["wd"]) + p["bd"][0]
    digits = jax.nn.softmax((logits + gumbel) / DIGIT_TEMP, axis=-1)
    hidden2 = jnp.concatenate([digits, hidden], axis=-1)
    wm1 = jnp.concatenate([p["wm1d"], p["wm1h"]], axis=0)
    ws1 = jnp.concatenate([p["ws1d"], p["ws1h"]], axis=0)
    mean = jax.nn.relu(hidden2 @ q(wm1) + p["bm1"][0]) @ q(p["wm2"]) + p["bm2"][0]
    std = jnp.exp(jax.nn.relu(hidden2 @ q(ws1) + p["bs1"][0]) @ q(p["ws2"]) + p["bs2"][0])
    z = mean + std * eps
    return digits, mean, std, z


if __name__ == "__main__":
    key = jax.random.PRNGKey(0)
    k_img, k_par, k_gum, k_eps = jax.random.split(key, 4)

    images = jax.random.uniform(k_img, (NUM_SAMPLES, BATCH, NUM_PIXELS), jnp.float32)
    params = make_params(k_par)
    w_slab = pack_weights(params)
    bias = pack_bias(params)

    # Gumbel noise for the concrete ('y') sample; standard normal for 'z'.
    u = jax.random.uniform(k_gum, (NUM_SAMPLES, BATCH, NUM_DIGITS), jnp.float32,
                           1e-6, 1.0 - 1e-6)
    gumbel = -jnp.log(-jnp.log(u))
    eps = jax.random.normal(k_eps, (NUM_SAMPLES, BATCH, NUM_STYLE), jnp.float32)

    digits, mean, std, z = encoder_forward(images, gumbel, eps, w_slab, bias)
    jax.block_until_ready((digits, mean, std, z))

    # TODO(synk): probtorch.Trace bookkeeping (log-prob accounting) and the
    # supervised value=labels branch of q.concrete have no Pallas equivalent;
    # only the sampled values (digits 'y', z) are produced here.
    r_digits, r_mean, r_std, r_z = reference_forward(images, gumbel, eps, params)
    assert jnp.allclose(digits, r_digits, atol=1e-3, rtol=1e-3)
    assert jnp.allclose(mean, r_mean, atol=1e-3, rtol=1e-3)
    assert jnp.allclose(std, r_std, atol=1e-3, rtol=1e-3)
    assert jnp.allclose(z, r_z, atol=1e-3, rtol=1e-3)

    print("KERNEL_OK")
</pallas_src>

<mosaic_0001>
module attributes {stable_mosaic.version = 11 : i64} {
  func.func @encoder_kernel(%arg0: i32, %arg1: memref<8x64xf32, #tpu.memory_space<vmem>>, %arg2: memref<8x10xf32, #tpu.memory_space<vmem>>, %arg3: memref<8x8xf32, #tpu.memory_space<vmem>>, %arg4: memref<464x128xbf16, #tpu.memory_space<vmem>>, %arg5: memref<4x128xf32, #tpu.memory_space<vmem>>, %arg6: memref<8x40xf32, #tpu.memory_space<vmem>>) attributes {dimension_semantics = [#tpu.dimension_semantics<parallel>], iteration_bounds = array<i64: 1>, scalar_prefetch = 0 : i64, scratch_operands = 0 : i64, tpu.core_type = #tpu.core_type<tc>, window_params = [{transform_indices = @transform_0, window_bounds = array<i64: 8, 64>}, {transform_indices = @transform_1, window_bounds = array<i64: 8, 10>}, {transform_indices = @transform_2, window_bounds = array<i64: 8, 8>}, {pipeline_mode = #tpu.pipeline_mode<synchronous>, transform_indices = @transform_3, window_bounds = array<i64: 464, 128>}, {pipeline_mode = #tpu.pipeline_mode<synchronous>, transform_indices = @transform_4, window_bounds = array<i64: 4, 128>}, {transform_indices = @transform_5, window_bounds = array<i64: 8, 40>}]} {
    %c0 = arith.constant 0 : index
    %c0_0 = arith.constant 0 : index
    %0 = vector.load %arg1[%c0, %c0_0] : memref<8x64xf32, #tpu.memory_space<vmem>>, vector<8x64xf32>
    %c0_1 = arith.constant 0 : index
    %c0_2 = arith.constant 0 : index
    %1 = vector.load %arg2[%c0_1, %c0_2] : memref<8x10xf32, #tpu.memory_space<vmem>>, vector<8x10xf32>
    %c0_3 = arith.constant 0 : index
    %c0_4 = arith.constant 0 : index
    %2 = vector.load %arg3[%c0_3, %c0_4] : memref<8x8xf32, #tpu.memory_space<vmem>>, vector<8x8xf32>
    %c0_5 = arith.constant 0 : index
    %c0_6 = arith.constant 0 : index
    %3 = vector.load %arg4[%c0_5, %c0_6] : memref<464x128xbf16, #tpu.memory_space<vmem>>, vector<64x128xbf16>
    %4 = arith.extf %3 : vector<64x128xbf16> to vector<64x128xf32>
    %c64 = arith.constant 64 : index
    %c0_7 = arith.constant 0 : index
    %5 = vector.load %arg4[%c64, %c0_7] : memref<464x128xbf16, #tpu.memory_space<vmem>>, vector<128x128xbf16>
    %6 = arith.extf %5 : vector<128x128xbf16> to vector<128x128xf32>
    %c192 = arith.constant 192 : index
    %c0_8 = arith.constant 0 : index
    %7 = vector.load %arg4[%c192, %c0_8] : memref<464x128xbf16, #tpu.memory_space<vmem>>, vector<128x128xbf16>
    %8 = arith.extf %7 : vector<128x128xbf16> to vector<128x128xf32>
    %c320 = arith.constant 320 : index
    %c0_9 = arith.constant 0 : index
    %9 = vector.load %arg4[%c320, %c0_9] : memref<464x128xbf16, #tpu.memory_space<vmem>>, vector<16x128xbf16>
    %10 = arith.extf %9 : vector<16x128xbf16> to vector<16x128xf32>
    %c336 = arith.constant 336 : index
    %c0_10 = arith.constant 0 : index
    %11 = vector.load %arg4[%c336, %c0_10] : memref<464x128xbf16, #tpu.memory_space<vmem>>, vector<128x128xbf16>
    %12 = arith.extf %11 : vector<128x128xbf16> to vector<128x128xf32>
    %c0_11 = arith.constant 0 : index
    %c0_12 = arith.constant 0 : index
    %13 = vector.load %arg5[%c0_11, %c0_12] : memref<4x128xf32, #tpu.memory_space<vmem>>, vector<1x128xf32>
    %c1 = arith.constant 1 : index
    %c0_13 = arith.constant 0 : index
    %14 = vector.load %arg5[%c1, %c0_13] : memref<4x128xf32, #tpu.memory_space<vmem>>, vector<1x128xf32>
    %c2 = arith.constant 2 : index
    %c0_14 = arith.constant 0 : index
    %15 = vector.load %arg5[%c2, %c0_14] : memref<4x128xf32, #tpu.memory_space<vmem>>, vector<1x128xf32>
    %c3 = arith.constant 3 : index
    %c0_15 = arith.constant 0 : index
    %16 = vector.load %arg5[%c3, %c0_15] : memref<4x128xf32, #tpu.memory_space<vmem>>, vector<1x128xf32>
    %cst = arith.constant dense<0.000000e+00> : vector<8x128xf32>
    %17 = tpu.matmul %0, %4, %cst {dimension_numbers = #tpu.dot_dimension_numbers<[1], [0], [0], [1], [0, 0, 1, 1], [], []>} : vector<8x64xf32>, vector<64x128xf32>, vector<8x128xf32> -> vector<8x128xf32>
    %18 = vector.broadcast %13 : vector<1x128xf32> to vector<8x128xf32>
    %19 = arith.addf %17, %18 : vector<8x128xf32>
    %cst_16 = arith.constant 0.000000e+00 : f32
    %20 = vector.broadcast %cst_16 : f32 to vector<8x128xf32>
    %21 = arith.maximumf %19, %20 : vector<8x128xf32>
    %cst_17 = arith.constant dense<0.000000e+00> : vector<8x128xf32>
    %22 = tpu.matmul %21, %6, %cst_17 {dimension_numbers = #tpu.dot_dimension_numbers<[1], [0], [0], [1], [0, 0, 1, 1], [], []>} : vector<8x128xf32>, vector<128x128xf32>, vector<8x128xf32> -> vector<8x128xf32>
    %23 = vector.broadcast %14 : vector<1x128xf32> to vector<8x128xf32>
    %24 = arith.addf %22, %23 : vector<8x128xf32>
    %25 = vector.extract_strided_slice %24 {offsets = [0, 0], sizes = [8, 16], strides = [1, 1]} : vector<8x128xf32> to vector<8x16xf32>
    %cst_18 = arith.constant 0.000000e+00 : f32
    %26 = vector.broadcast %cst_18 : f32 to vector<8x6xf32>
    %27 = tpu.concatenate %1, %26 in 1 : vector<8x10xf32>, vector<8x6xf32> -> vector<8x16xf32>
    %28 = tpu.iota {dimensions = array<i32: 1>} : vector<8x16xi32>
    %29 = arith.addf %25, %27 : vector<8x16xf32>
    %cst_19 = arith.constant 1.5151515 : f32
    %30 = vector.broadcast %cst_19 : f32 to vector<8x16xf32>
    %31 = arith.mulf %29, %30 : vector<8x16xf32>
    %c10_i32 = arith.constant 10 : i32
    %32 = vector.broadcast %c10_i32 : i32 to vector<8x16xi32>
    %33 = arith.cmpi slt, %28, %32 : vector<8x16xi32>
    %cst_20 = arith.constant -1.000000e+30 : f32
    %34 = vector.broadcast %cst_20 : f32 to vector<8x16xf32>
    %35 = arith.select %33, %31, %34 : vector<8x16xi1>, vector<8x16xf32>
    %cst_21 = arith.constant dense<0xFF800000> : vector<8xf32>
    %36 = vector.multi_reduction <maximumf>, %35, %cst_21 [1] : vector<8x16xf32> to vector<8xf32>
    %37 = vector.shape_cast %36 : vector<8xf32> to vector<8x1xf32>
    %38 = vector.broadcast %37 : vector<8x1xf32> to vector<8x16xf32>
    %39 = arith.subf %35, %38 : vector<8x16xf32>
    %40 = math.exp %39 : vector<8x16xf32>
    %cst_22 = arith.constant dense<0.000000e+00> : vector<8xf32>
    %41 = vector.multi_reduction <add>, %40, %cst_22 [1] : vector<8x16xf32> to vector<8xf32>
    %42 = vector.shape_cast %41 : vector<8xf32> to vector<8x1xf32>
    %43 = vector.broadcast %42 : vector<8x1xf32> to vector<8x16xf32>
    %44 = arith.divf %40, %43 : vector<8x16xf32>
    %cst_23 = arith.constant dense<0.000000e+00> : vector<8x128xf32>
    %45 = tpu.matmul %44, %10, %cst_23 {dimension_numbers = #tpu.dot_dimension_numbers<[1], [0], [0], [1], [0, 0, 1, 1], [], []>} : vector<8x16xf32>, vector<16x128xf32>, vector<8x128xf32> -> vector<8x128xf32>
    %cst_24 = arith.constant dense<0.000000e+00> : vector<8x128xf32>
    %46 = tpu.matmul %21, %8, %cst_24 {dimension_numbers = #tpu.dot_dimension_numbers<[1], [0], [0], [1], [0, 0, 1, 1], [], []>} : vector<8x128xf32>, vector<128x128xf32>, vector<8x128xf32> -> vector<8x128xf32>
    %47 = arith.addf %45, %46 : vector<8x128xf32>
    %48 = vector.broadcast %15 : vector<1x128xf32> to vector<8x128xf32>
    %49 = arith.addf %47, %48 : vector<8x128xf32>
    %cst_25 = arith.constant 0.000000e+00 : f32
    %50 = vector.broadcast %cst_25 : f32 to vector<8x128xf32>
    %51 = arith.maximumf %49, %50 : vector<8x128xf32>
    %cst_26 = arith.constant dense<0.000000e+00> : vector<8x128xf32>
    %52 = tpu.matmul %51, %12, %cst_26 {dimension_numbers = #tpu.dot_dimension_numbers<[1], [0], [0], [1], [0, 0, 1, 1], [], []>} : vector<8x128xf32>, vector<128x128xf32>, vector<8x128xf32> -> vector<8x128xf32>
    %53 = vector.broadcast %16 : vector<1x128xf32> to vector<8x128xf32>
    %54 = arith.addf %52, %53 : vector<8x128xf32>
    %55 = vector.extract_strided_slice %54 {offsets = [0, 0], sizes = [8, 8], strides = [1, 1]} : vector<8x128xf32> to vector<8x8xf32>
    %56 = vector.extract_strided_slice %54 {offsets = [0, 8], sizes = [8, 8], strides = [1, 1]} : vector<8x128xf32> to vector<8x8xf32>
    %57 = math.exp %56 : vector<8x8xf32>
    %58 = arith.mulf %57, %2 : vector<8x8xf32>
    %59 = arith.addf %55, %58 : vector<8x8xf32>
    %c0_27 = arith.constant 0 : index
    %c0_28 = arith.constant 0 : index
    %60 = vector.load %arg6[%c0_27, %c0_28] : memref<8x40xf32, #tpu.memory_space<vmem>>, vector<8x16xf32>
    tpu.vector_store %arg6[%c0_27, %c0_28], %44 {strides = array<i32>} : memref<8x40xf32, #tpu.memory_space<vmem>>, vector<8x16xf32>,
    %c0_29 = arith.constant 0 : index
    %c16 = arith.constant 16 : index
    %61 = vector.load %arg6[%c0_29, %c16] : memref<8x40xf32, #tpu.memory_space<vmem>>, vector<8x8xf32>
    tpu.vector_store %arg6[%c0_29, %c16], %55 {strides = array<i32>} : memref<8x40xf32, #tpu.memory_space<vmem>>, vector<8x8xf32>,
    %c0_30 = arith.constant 0 : index
    %c24 = arith.constant 24 : index
    %62 = vector.load %arg6[%c0_30, %c24] : memref<8x40xf32, #tpu.memory_space<vmem>>, vector<8x8xf32>
    tpu.vector_store %arg6[%c0_30, %c24], %57 {strides = array<i32>} : memref<8x40xf32, #tpu.memory_space<vmem>>, vector<8x8xf32>,
    %c0_31 = arith.constant 0 : index
    %c32 = arith.constant 32 : index
    %63 = vector.load %arg6[%c0_31, %c32] : memref<8x40xf32, #tpu.memory_space<vmem>>, vector<8x8xf32>
    tpu.vector_store %arg6[%c0_31, %c32], %59 {strides = array<i32>} : memref<8x40xf32, #tpu.memory_space<vmem>>, vector<8x8xf32>,
    return
  }
  func.func @transform_0(%arg0: i32) -> (i32, i32) {
    %c0_i32 = arith.constant 0 : i32
    %c0_i32_0 = arith.constant 0 : i32
    return %arg0, %c0_i32 : i32, i32
  }
  func.func @transform_1(%arg0: i32) -> (i32, i32) {
    %c0_i32 = arith.constant 0 : i32
    %c0_i32_0 = arith.constant 0 : i32
    return %arg0, %c0_i32 : i32, i32
  }
  func.func @transform_2(%arg0: i32) -> (i32, i32) {
    %c0_i32 = arith.constant 0 : i32
    %c0_i32_0 = arith.constant 0 : i32
    return %arg0, %c0_i32 : i32, i32
  }
  func.func @transform_3(%arg0: i32) -> (i32, i32) {
    %c0_i32 = arith.constant 0 : i32
    %c0_i32_0 = arith.constant 0 : i32
    %c0_i32_1 = arith.constant 0 : i32
    return %c0_i32, %c0_i32_0 : i32, i32
  }
  func.func @transform_4(%arg0: i32) -> (i32, i32) {
    %c0_i32 = arith.constant 0 : i32
    %c0_i32_0 = arith.constant 0 : i32
    %c0_i32_1 = arith.constant 0 : i32
    return %c0_i32, %c0_i32_0 : i32, i32
  }
  func.func @transform_5(%arg0: i32) -> (i32, i32) {
    %c0_i32 = arith.constant 0 : i32
    %c0_i32_0 = arith.constant 0 : i32
    return %arg0, %c0_i32 : i32, i32
  }
}

</mosaic_0001>

<llo_original>
// kernel: encoder_forward.1
$region0: #{encoder_forward.1}
  #allocation0 [shape = 'u32[]', space=smem, size = 0x4, offset = 0x4, fixed_abs, tag = 'smem constant byte address 0x4 - core index']
  #allocation1 [shape = 'u32[144,128]{1,0:T(1,128)}', space=vmem, size = 0x12000, scoped, tag = 'internal scratch']
  %s0 = inlined_call_operand.hbm [shape: f32[8,64], index: 0, kind: input, shape index: {}]
  %s1 = inlined_call_operand.hbm [shape: f32[8,10], index: 1, kind: input, shape index: {}]
  %s2 = inlined_call_operand.vmem [shape: f32[8,8], index: 2, kind: input, shape index: {}]
  %s3 = inlined_call_operand.hbm [shape: bf16[464,128], index: 3, kind: input, shape index: {}]
  %s4 = inlined_call_operand.vmem [shape: f32[4,128], index: 4, kind: input, shape index: {}]
  %s5 = inlined_call_operand.vmem [shape: f32[8,40], index: 5, kind: output, shape index: {}]
  %s6 = sld [smem:[#allocation0]]
  $region42: #{encoder_forward.1} parent=0
    _
  %s8 = ssub.s32 1, %s6
  %s9 = scalar_select 0, %s8, %s6
  $region1: #{encoder_forward.1} parent=0
    #allocation2 [shape = 'u8[4096]{0}', space=vmem, size = 0x1000, scoped, tag = 'input window, operand 0, single buffered']
    #allocation3 [shape = 's32[1]{0}', space=sflag, size = 0x4, scoped, tag = 'scoped memory for encoder_forward.1']
    #allocation4 [shape = 'u8[4096]{0}', space=vmem, size = 0x1000, scoped, tag = 'input window, operand 1, single buffered']
    #allocation5 [shape = 's32[1]{0}', space=sflag, size = 0x4, scoped, tag = 'scoped memory for encoder_forward.1']
    #allocation6 [shape = 'u8[118784]{0}', space=vmem, size = 0x1d000, scoped, tag = 'input window, operand 3, single buffered']
    %10 = vsyncpa [#allocation3], 0
    %11 = vsyncpa [#allocation5], 0
    // Predicated region
    $region2: #{encoder_forward.1} parent=1 // pred_check
      _
    $region3: #{encoder_forward.1} parent=1 // pred_check_branch
      %13 = sbr.rel (0) target = $region5
    $region4: #{encoder_forward.1} parent=1 // pred_region
      %s15 = ssub.s32 128, 128
      %16 = vsyncadd [#allocation3], %s15
      %s18 = sshll.u32 [#allocation2], 4
      %s19 = int_to_ptr.vmem [resolvable:$true] %s18
      %21 = dma.hbm_to_vmem [thread:$0]  %s0, 128, %s19, [#allocation3]
    $region5: #{encoder_forward.1} parent=1 // pred_fallthru
      _
    // Predicated region
    $region6: #{encoder_forward.1} parent=1 // pred_check
      _
    $region7: #{encoder_forward.1} parent=1 // pred_check_branch
      %23 = sbr.rel (0) target = $region9
    $region8: #{encoder_forward.1} parent=1 // pred_region
      %s25 = ssub.s32 128, 128
      %26 = vsyncadd [#allocation5], %s25
      %s28 = sshll.u32 [#allocation4], 4
      %s29 = int_to_ptr.vmem [resolvable:$true] %s28
      %31 = dma.hbm_to_vmem [thread:$0]  %s1, 128, %s29, [#allocation5]
    $region9: #{encoder_forward.1} parent=1 // pred_fallthru
      _
    // Predicated region
    $region10: #{encoder_forward.1} parent=1 // pred_check
      _
    $region11: #{encoder_forward.1} parent=1 // pred_check_branch
      %33 = sbr.rel (0) target = $region13
    $region12: #{encoder_forward.1} parent=1 // pred_region
      _
    $region13: #{encoder_forward.1} parent=1 // pred_fallthru
      _
    // Predicated region
    $region14: #{encoder_forward.1} parent=1 // pred_check
      _
    $region15: #{encoder_forward.1} parent=1 // pred_check_branch
      %35 = sbr.rel (0) target = $region17
    $region16: #{encoder_forward.1} parent=1 // pred_region
      %s37 = ssub.s32 3712, 3712
      %38 = vsyncadd [#allocation5], %s37
      %s39 = sshll.u32 [#allocation6], 4
      %s40 = int_to_ptr.vmem [resolvable:$true] %s39
      %45 = dma.hbm_to_vmem [thread:$0]  %s3, 3712, %s40, [#allocation5], 64, 64, 4
    $region17: #{encoder_forward.1} parent=1 // pred_fallthru
      _
    // Predicated region
    $region18: #{encoder_forward.1} parent=1 // pred_check
      _
    $region19: #{encoder_forward.1} parent=1 // pred_check_branch
      %47 = sbr.rel (0) target = $region21
    $region20: #{encoder_forward.1} parent=1 // pred_region
      _
    $region21: #{encoder_forward.1} parent=1 // pred_fallthru
      _
    // Predicated region
    $region22: #{encoder_forward.1} parent=1 // pred_check
      _
    $region23: #{encoder_forward.1} parent=1 // pred_check_branch
      %49 = sbr.rel (0) target = $region25
    $region24: #{encoder_forward.1} parent=1 // pred_region
      %50 = dma.done [#allocation3], 128
    $region25: #{encoder_forward.1} parent=1 // pred_fallthru
      _
    // Predicated region
    $region26: #{encoder_forward.1} parent=1 // pred_check
      _
    $region27: #{encoder_forward.1} parent=1 // pred_check_branch
      %52 = sbr.rel (0) target = $region29
    $region28: #{encoder_forward.1} parent=1 // pred_region
      %53 = dma.done [#allocation5], 128
    $region29: #{encoder_forward.1} parent=1 // pred_fallthru
      _
    // Predicated region
    $region30: #{encoder_forward.1} parent=1 // pred_check
      _
    $region31: #{encoder_forward.1} parent=1 // pred_check_branch
      %55 = sbr.rel (0) target = $region33
    $region32: #{encoder_forward.1} parent=1 // pred_region
      %56 = dma.done [#allocation5], 3712
    $region33: #{encoder_forward.1} parent=1 // pred_fallthru
      _
    %v57 = vld [vmem:[#allocation2] sm:$0xff]
    %v58 = vld [vmem:[#allocation4] sm:$0xff]
    %v59 = vld [vmem:[%s2] sm:$0xff]
    %v60 = vld [vmem:[#allocation6] sm:$0xf]
    %v61 = vld [vmem:[#allocation6 + $0x4] sm:$0xf]
    %v62 = vld [vmem:[#allocation6 + $0x8] sm:$0xf]
    %v63 = vld [vmem:[#allocation6 + $0xc] sm:$0xf]
    %v64 = vld [vmem:[#allocation6 + $0x10] sm:$0xf]
    %v65 = vld [vmem:[#allocation6 + $0x14] sm:$0xf]
    %v66 = vld [vmem:[#allocation6 + $0x18] sm:$0xf]
    %v67 = vld [vmem:[#allocation6 + $0x1c] sm:$0xf]
    %v68 = vunpack.c.l.bf16 %v60
    %v69 = vunpack.c.l.bf16 %v61
    %v70 = vunpack.c.l.bf16 %v62
    %v71 = vunpack.c.l.bf16 %v63
    %v72 = vunpack.c.l.bf16 %v64
    %v73 = vunpack.c.l.bf16 %v65
    %v74 = vunpack.c.l.bf16 %v66
    %v75 = vunpack.c.l.bf16 %v67
    %v76 = vld [vmem:[#allocation6 + $0x20] sm:$0xf]
    %v77 = vld [vmem:[#allocation6 + $0x24] sm:$0xf]
    %v78 = vld [vmem:[#allocation6 + $0x28] sm:$0xf]
    %v79 = vld [vmem:[#allocation6 + $0x2c] sm:$0xf]
    %v80 = vld [vmem:[#allocation6 + $0x30] sm:$0xf]
    %v81 = vld [vmem:[#allocation6 + $0x34] sm:$0xf]
    %v82 = vld [vmem:[#allocation6 + $0x38] sm:$0xf]
    %v83 = vld [vmem:[#allocation6 + $0x3c] sm:$0xf]
    %v84 = vld [vmem:[#allocation6 + $0x40] sm:$0xf]
    %v85 = vld [vmem:[#allocation6 + $0x44] sm:$0xf]
    %v86 = vld [vmem:[#allocation6 + $0x48] sm:$0xf]
    %v87 = vld [vmem:[#allocation6 + $0x4c] sm:$0xf]
    %v88 = vld [vmem:[#allocation6 + $0x50] sm:$0xf]
    %v89 = vld [vmem:[#allocation6 + $0x54] sm:$0xf]
    %v90 = vld [vmem:[#allocation6 + $0x58] sm:$0xf]
    %v91 = vld [vmem:[#allocation6 + $0x5c] sm:$0xf]
    %v92 = vunpack.c.l.bf16 %v76
    %v93 = vunpack.c.l.bf16 %v77
    %v94 = vunpack.c.l.bf16 %v78
    %v95 = vunpack.c.l.bf16 %v79
    %v96 = vunpack.c.l.bf16 %v80
    %v97 = vunpack.c.l.bf16 %v81
    %v98 = vunpack.c.l.bf16 %v82
    %v99 = vunpack.c.l.bf16 %v83
    %v100 = vunpack.c.l.bf16 %v84
    %v101 = vunpack.c.l.bf16 %v85
    %v102 = vunpack.c.l.bf16 %v86
    %v103 = vunpack.c.l.bf16 %v87
    %v104 = vunpack.c.l.bf16 %v88
    %v105 = vunpack.c.l.bf16 %v89
    %v106 = vunpack.c.l.bf16 %v90
    %v107 = vunpack.c.l.bf16 %v91
    %v108 = vld [vmem:[#allocation6 + $0x60] sm:$0xf]
    %v109 = vld [vmem:[#allocation6 + $0x64] sm:$0xf]
    %v110 = vld [vmem:[#allocation6 + $0x68] sm:$0xf]
    %v111 = vld [vmem:[#allocation6 + $0x6c] sm:$0xf]
    %v112 = vld [vmem:[#allocation6 + $0x70] sm:$0xf]
    %v113 = vld [vmem:[#allocation6 + $0x74] sm:$0xf]
    %v114 = vld [vmem:[#allocation6 + $0x78] sm:$0xf]
    %v115 = vld [vmem:[#allocation6 + $0x7c] sm:$0xf]
    %v116 = vld [vmem:[#allocation6 + $0x80] sm:$0xf]
    %v117 = vld [vmem:[#allocation6 + $0x84] sm:$0xf]
    %v118 = vld [vmem:[#allocation6 + $0x88] sm:$0xf]
    %v119 = vld [vmem:[#allocation6 + $0x8c] sm:$0xf]
    %v120 = vld [vmem:[#allocation6 + $0x90] sm:$0xf]
    %v121 = vld [vmem:[#allocation6 + $0x94] sm:$0xf]
    %v122 = vld [vmem:[#allocation6 + $0x98] sm:$0xf]
    %v123 = vld [vmem:[#allocation6 + $0x9c] sm:$0xf]
    %v124 = vunpack.c.l.bf16 %v108
    %v125 = vunpack.c.l.bf16 %v109
    %v126 = vunpack.c.l.bf16 %v110
    %v127 = vunpack.c.l.bf16 %v111
    %v128 = vunpack.c.l.bf16 %v112
    %v129 = vunpack.c.l.bf16 %v113
    %v130 = vunpack.c.l.bf16 %v114
    %v131 = vunpack.c.l.bf16 %v115
    %v132 = vunpack.c.l.bf16 %v116
    %v133 = vunpack.c.l.bf16 %v117
    %v134 = vunpack.c.l.bf16 %v118
    %v135 = vunpack.c.l.bf16 %v119
    %v136 = vunpack.c.l.bf16 %v120
    %v137 = vunpack.c.l.bf16 %v121
    %v138 = vunpack.c.l.bf16 %v122
    %v139 = vunpack.c.l.bf16 %v123
    %v140 = vld [vmem:[#allocation6 + $0xa0] sm:$0xf]
    %v141 = vld [vmem:[#allocation6 + $0xa4] sm:$0xf]
    %v142 = vunpack.c.l.bf16 %v140
    %v143 = vunpack.c.l.bf16 %v141
    %v144 = vld [vmem:[#allocation6 + $0xa8] sm:$0xf]
    %v145 = vld [vmem:[#allocation6 + $0xac] sm:$0xf]
    %v146 = vld [vmem:[#allocation6 + $0xb0] sm:$0xf]
    %v147 = vld [vmem:[#allocation6 + $0xb4] sm:$0xf]
    %v148 = vld [vmem:[#allocation6 + $0xb8] sm:$0xf]
    %v149 = vld [vmem:[#allocation6 + $0xbc] sm:$0xf]
    %v150 = vld [vmem:[#allocation6 + $0xc0] sm:$0xf]
    %v151 = vld [vmem:[#allocation6 + $0xc4] sm:$0xf]
    %v152 = vld [vmem:[#allocation6 + $0xc8] sm:$0xf]
    %v153 = vld [vmem:[#allocation6 + $0xcc] sm:$0xf]
    %v154 = vld [vmem:[#allocation6 + $0xd0] sm:$0xf]
    %v155 = vld [vmem:[#allocation6 + $0xd4] sm:$0xf]
    %v156 = vld [vmem:[#allocation6 + $0xd8] sm:$0xf]
    %v157 = vld [vmem:[#allocation6 + $0xdc] sm:$0xf]
    %v158 = vld [vmem:[#allocation6 + $0xe0] sm:$0xf]
    %v159 = vld [vmem:[#allocation6 + $0xe4] sm:$0xf]
    %v160 = vunpack.c.l.bf16 %v144
    %v161 = vunpack.c.l.bf16 %v145
    %v162 = vunpack.c.l.bf16 %v146
    %v163 = vunpack.c.l.bf16 %v147
    %v164 = vunpack.c.l.bf16 %v148
    %v165 = vunpack.c.l.bf16 %v149
    %v166 = vunpack.c.l.bf16 %v150
    %v167 = vunpack.c.l.bf16 %v151
    %v168 = vunpack.c.l.bf16 %v152
    %v169 = vunpack.c.l.bf16 %v153
    %v170 = vunpack.c.l.bf16 %v154
    %v171 = vunpack.c.l.bf16 %v155
    %v172 = vunpack.c.l.bf16 %v156
    %v173 = vunpack.c.l.bf16 %v157
    %v174 = vunpack.c.l.bf16 %v158
    %v175 = vunpack.c.l.bf16 %v159
    %v176 = vld [vmem:[%s4] sm:$0x1]
    %v177 = vld [vmem:[%s4 + $0x1] sm:$0x1]
    %v178 = vld [vmem:[%s4 + $0x2] sm:$0x1]
    %v179 = vld [vmem:[%s4 + $0x3] sm:$0x1]
    %v180 = vlaneseq
    %v181 = vshrl.u32 %v180, 7
    %v182 = vsub.s32 0, %v181
    %v183 = vrot.slane %v176, %v182
    %vm184 = vcmask 523264
    %v186 = vsel %vm184, %v57, 0
    %188 = vmatprep.subr.mxu0 0.0
    %189 = vmatpush1.msra.mxu0 0.0
    %190 = vmatprep.subr.mxu0 0.0
    %191 = vmatpush1.msra.mxu0 0.0
    %192 = vmatprep.subr.mxu0 0.0
    %193 = vmatpush1.msra.mxu0 0.0
    %194 = vmatprep.subr.mxu0 0.0
    %195 = vmatpush1.msra.mxu0 0.0
    %196 = vmatprep.subr.mxu0 0.0
    %197 = vmatpush1.msra.mxu0 0.0
    %198 = vmatprep.subr.mxu0 0.0
    %199 = vmatpush1.msra.mxu0 0.0
    %200 = vmatprep.subr.mxu0 0.0
    %201 = vmatpush1.msra.mxu0 0.0
    %202 = vmatprep.subr.mxu0 0.0
    %203 = vmatpush1.msra.mxu0 0.0
    %204 = vmatprep.subr.mxu0 0.0
    %205 = vmatpush1.msra.mxu0 %v75
    %206 = vmatprep.subr.mxu0 0.0
    %207 = vmatpush1.msra.mxu0 %v74
    %208 = vmatprep.subr.mxu0 0.0
    %209 = vmatpush1.msra.mxu0 %v73
    %210 = vmatprep.subr.mxu0 0.0
    %211 = vmatpush1.msra.mxu0 %v72
    %212 = vmatprep.subr.mxu0 0.0
    %213 = vmatpush1.msra.mxu0 %v71
    %214 = vmatprep.subr.mxu0 0.0
    %215 = vmatpush1.msra.mxu0 %v70
    %216 = vmatprep.subr.mxu0 0.0
    %217 = vmatpush1.msra.mxu0 %v69
    %218 = vmatprep.subr.mxu0 0.0
    %219 = vmatpush1.msra.mxu0 %v68
    %220 = vmatprep.subr.mxu0 0.0
    %221 = vmatpush2.msra.mxu0 0.0
    %222 = vmatprep.subr.mxu0 0.0
    %223 = vmatpush2.msra.mxu0 0.0
    %224 = vmatprep.subr.mxu0 0.0
    %225 = vmatpush2.msra.mxu0 0.0
    %226 = vmatprep.subr.mxu0 0.0
    %227 = vmatpush2.msra.mxu0 0.0
    %228 = vmatprep.subr.mxu0 0.0
    %229 = vmatpush2.msra.mxu0 0.0
    %230 = vmatprep.subr.mxu0 0.0
    %231 = vmatpush2.msra.mxu0 0.0
    %232 = vmatprep.subr.mxu0 0.0
    %233 = vmatpush2.msra.mxu0 0.0
    %234 = vmatprep.subr.mxu0 0.0
    %235 = vmatpush2.msra.mxu0 0.0
    %236 = vmatprep.subr.mxu0 0.0
    %237 = vmatpush2.msra.mxu0 0.0
    %238 = vmatprep.subr.mxu0 0.0
    %239 = vmatpush2.msra.mxu0 0.0
    %240 = vmatprep.subr.mxu0 0.0
    %241 = vmatpush2.msra.mxu0 0.0
    %242 = vmatprep.subr.mxu0 0.0
    %243 = vmatpush2.msra.mxu0 0.0
    %244 = vmatprep.subr.mxu0 0.0
    %245 = vmatpush2.msra.mxu0 0.0
    %246 = vmatprep.subr.mxu0 0.0
    %247 = vmatpush2.msra.mxu0 0.0
    %248 = vmatprep.subr.mxu0 0.0
    %249 = vmatpush2.msra.mxu0 0.0
    %250 = vmatprep.subr.mxu0 0.0
    %251 = vmatpush2.msra.mxu0 0.0
    %252 = vmatprep.mubr.f32.mxu0 0.0
    %253 = vmatmul.mubr.f32.gmra.mxu0 %v186
    %v254 = vpop.f32.mrf.mxu0
    %v255 = vadd.f32 %v183, %v254
    %v256 = vpop.f32.mrf.mxu0
    %257 = vdwg.mxu0
    %v258 = vmax.f32 %v255, 0.0
    %v259 = vlaneseq
    %v260 = vshrl.u32 %v259, 7
    %v261 = vsub.s32 0, %v260
    %v262 = vrot.slane %v177, %v261
    %263 = vmatprep.subr.mxu0 0.0
    %264 = vmatpush1.msra.mxu0 %v107
    %265 = vmatprep.subr.mxu0 0.0
    %266 = vmatpush1.msra.mxu0 %v106
    %267 = vmatprep.subr.mxu0 0.0
    %268 = vmatpush1.msra.mxu0 %v105
    %269 = vmatprep.subr.mxu0 0.0
    %270 = vmatpush1.msra.mxu0 %v104
    %271 = vmatprep.subr.mxu0 0.0
    %272 = vmatpush1.msra.mxu0 %v103
    %273 = vmatprep.subr.mxu0 0.0
    %274 = vmatpush1.msra.mxu0 %v102
    %275 = vmatprep.subr.mxu0 0.0
    %276 = vmatpush1.msra.mxu0 %v101
    %277 = vmatprep.subr.mxu0 0.0
    %278 = vmatpush1.msra.mxu0 %v100
    %279 = vmatprep.subr.mxu0 0.0
    %280 = vmatpush1.msra.mxu0 %v99
    %281 = vmatprep.subr.mxu0 0.0
    %282 = vmatpush1.msra.mxu0 %v98
    %283 = vmatprep.subr.mxu0 0.0
    %284 = vmatpush1.msra.mxu0 %v97
    %285 = vmatprep.subr.mxu0 0.0
    %286 = vmatpush1.msra.mxu0 %v96
    %287 = vmatprep.subr.mxu0 0.0
    %288 = vmatpush1.msra.mxu0 %v95
    %289 = vmatprep.subr.mxu0 0.0
    %290 = vmatpush1.msra.mxu0 %v94
    %291 = vmatprep.subr.mxu0 0.0
    %292 = vmatpush1.msra.mxu0 %v93
    %293 = vmatprep.subr.mxu0 0.0
    %294 = vmatpush1.msra.mxu0 %v92
    %295 = vmatprep.subr.mxu0 0.0
    %296 = vmatpush2.msra.mxu0 0.0
    %297 = vmatprep.subr.mxu0 0.0
    %298 = vmatpush2.msra.mxu0 0.0
    %299 = vmatprep.subr.mxu0 0.0
    %300 = vmatpush2.msra.mxu0 0.0
    %301 = vmatprep.subr.mxu0 0.0
    %302 = vmatpush2.msra.mxu0 0.0
    %303 = vmatprep.subr.mxu0 0.0
    %304 = vmatpush2.msra.mxu0 0.0
    %305 = vmatprep.subr.mxu0 0.0
    %306 = vmatpush2.msra.mxu0 0.0
    %307 = vmatprep.subr.mxu0 0.0
    %308 = vmatpush2.msra.mxu0 0.0
    %309 = vmatprep.subr.mxu0 0.0
    %310 = vmatpush2.msra.mxu0 0.0
    %311 = vmatprep.subr.mxu0 0.0
    %312 = vmatpush2.msra.mxu0 0.0
    %313 = vmatprep.subr.mxu0 0.0
    %314 = vmatpush2.msra.mxu0 0.0
    %315 = vmatprep.subr.mxu0 0.0
    %316 = vmatpush2.msra.mxu0 0.0
    %317 = vmatprep.subr.mxu0 0.0
    %318 = vmatpush2.msra.mxu0 0.0
    %319 = vmatprep.subr.mxu0 0.0
    %320 = vmatpush2.msra.mxu0 0.0
    %321 = vmatprep.subr.mxu0 0.0
    %322 = vmatpush2.msra.mxu0 0.0
    %323 = vmatprep.subr.mxu0 0.0
    %324 = vmatpush2.msra.mxu0 0.0
    %325 = vmatprep.subr.mxu0 0.0
    %326 = vmatpush2.msra.mxu0 0.0
    %327 = vmatprep.mubr.f32.mxu0 0.0
    %328 = vmatmul.mubr.f32.gmra.mxu0 %v258
    %v329 = vpop.f32.mrf.mxu0
    %v330 = vadd.f32 %v262, %v329
    %v331 = vpop.f32.mrf.mxu0
    %332 = vdwg.mxu0
    %vm333 = vcmask 80896
    %v334 = vsel %vm333, %v58, 0.0
    %v335 = vlaneseq
    %v336 = vand.u32 %v335, 127
    %v337 = vadd.f32 %v330, %v334
    %v338 = vmul.f32 %v337, 1.5151515
    %vm339 = vcmp.lt.s32.totalorder %v336, 10
    %v340 = vsel %vm339, %v338, -1e+30
    %vm341 = vcmask 130048
    %v342 = vsel %vm341, %v340, -inf
    %343 = vmax.xlane.f32.xlu0 %v342
    %v344 = vpop.xlane.xlu0 %343
    %v345 = vsub.f32 %v340, %v344
    %v346 = vmul.f32 %v345, 1.442695
    %v347 = vpow.pop %v346
    %v348 = vsel %vm341, %v347, 0.0
    %349 = vadd.xlane.f32.xlu0 %v348
    %v350 = vpop.xlane.xlu0 %349
    %v351 = vrcp.pop %v350
    %v352 = vmul.f32 %v347, %v351
    %353 = vmatprep.subr.mxu0 0.0
    %354 = vmatpush1.msra.mxu0 %v139
    %355 = vmatprep.subr.mxu0 0.0
    %356 = vmatpush1.msra.mxu0 %v138
    %357 = vmatprep.subr.mxu0 0.0
    %358 = vmatpush1.msra.mxu0 %v137
    %359 = vmatprep.subr.mxu0 0.0
    %360 = vmatpush1.msra.mxu0 %v136
    %361 = vmatprep.subr.mxu0 0.0
    %362 = vmatpush1.msra.mxu0 %v135
    %363 = vmatprep.subr.mxu0 0.0
    %364 = vmatpush1.msra.mxu0 %v134
    %365 = vmatprep.subr.mxu0 0.0
    %366 = vmatpush1.msra.mxu0 %v133
    %367 = vmatprep.subr.mxu0 0.0
    %368 = vmatpush1.msra.mxu0 %v132
    %369 = vmatprep.subr.mxu0 0.0
    %370 = vmatpush1.msra.mxu0 %v131
    %371 = vmatprep.subr.mxu0 0.0
    %372 = vmatpush1.msra.mxu0 %v130
    %373 = vmatprep.subr.mxu0 0.0
    %374 = vmatpush1.msra.mxu0 %v129
    %375 = vmatprep.subr.mxu0 0.0
    %376 = vmatpush1.msra.mxu0 %v128
    %377 = vmatprep.subr.mxu0 0.0
    %378 = vmatpush1.msra.mxu0 %v127
    %379 = vmatprep.subr.mxu0 0.0
    %380 = vmatpush1.msra.mxu0 %v126
    %381 = vmatprep.subr.mxu0 0.0
    %382 = vmatpush1.msra.mxu0 %v125
    %383 = vmatprep.subr.mxu0 0.0
    %384 = vmatpush1.msra.mxu0 %v124
    %385 = vmatprep.subr.mxu0 0.0
    %386 = vmatpush2.msra.mxu0 0.0
    %387 = vmatprep.subr.mxu0 0.0
    %388 = vmatpush2.msra.mxu0 0.0
    %389 = vmatprep.subr.mxu0 0.0
    %390 = vmatpush2.msra.mxu0 0.0
    %391 = vmatprep.subr.mxu0 0.0
    %392 = vmatpush2.msra.mxu0 0.0
    %393 = vmatprep.subr.mxu0 0.0
    %394 = vmatpush2.msra.mxu0 0.0
    %395 = vmatprep.subr.mxu0 0.0
    %396 = vmatpush2.msra.mxu0 0.0
    %397 = vmatprep.subr.mxu0 0.0
    %398 = vmatpush2.msra.mxu0 0.0
    %399 = vmatprep.subr.mxu0 0.0
    %400 = vmatpush2.msra.mxu0 0.0
    %401 = vmatprep.subr.mxu0 0.0
    %402 = vmatpush2.msra.mxu0 0.0
    %403 = vmatprep.subr.mxu0 0.0
    %404 = vmatpush2.msra.mxu0 0.0
    %405 = vmatprep.subr.mxu0 0.0
    %406 = vmatpush2.msra.mxu0 0.0
    %407 = vmatprep.subr.mxu0 0.0
    %408 = vmatpush2.msra.mxu0 0.0
    %409 = vmatprep.subr.mxu0 0.0
    %410 = vmatpush2.msra.mxu0 0.0
    %411 = vmatprep.subr.mxu0 0.0
    %412 = vmatpush2.msra.mxu0 0.0
    %413 = vmatprep.subr.mxu0 0.0
    %414 = vmatpush2.msra.mxu0 0.0
    %415 = vmatprep.subr.mxu0 0.0
    %416 = vmatpush2.msra.mxu0 0.0
    %417 = vmatprep.mubr.f32.mxu0 0.0
    %418 = vmatmul.mubr.f32.gmra.mxu0 %v258
    %v419 = vpop.f32.mrf.mxu0
    %v420 = vadd.f32 0.0, %v419
    %v421 = vpop.f32.mrf.mxu0
    %422 = vdwg.mxu0
    %v424 = vsel %vm341, %v352, 0
    %426 = vmatprep.subr.mxu0 0.0
    %427 = vmatpush1.msra.mxu0 0.0
    %428 = vmatprep.subr.mxu0 0.0
    %429 = vmatpush1.msra.mxu0 0.0
    %430 = vmatprep.subr.mxu0 0.0
    %431 = vmatpush1.msra.mxu0 0.0
    %432 = vmatprep.subr.mxu0 0.0
    %433 = vmatpush1.msra.mxu0 0.0
    %434 = vmatprep.subr.mxu0 0.0
    %435 = vmatpush1.msra.mxu0 0.0
    %436 = vmatprep.subr.mxu0 0.0
    %437 = vmatpush1.msra.mxu0 0.0
    %438 = vmatprep.subr.mxu0 0.0
    %439 = vmatpush1.msra.mxu0 0.0
    %440 = vmatprep.subr.mxu0 0.0
    %441 = vmatpush1.msra.mxu0 0.0
    %442 = vmatprep.subr.mxu0 0.0
    %443 = vmatpush1.msra.mxu0 0.0
    %444 = vmatprep.subr.mxu0 0.0
    %445 = vmatpush1.msra.mxu0 0.0
    %446 = vmatprep.subr.mxu0 0.0
    %447 = vmatpush1.msra.mxu0 0.0
    %448 = vmatprep.subr.mxu0 0.0
    %449 = vmatpush1.msra.mxu0 0.0
    %450 = vmatprep.subr.mxu0 0.0
    %451 = vmatpush1.msra.mxu0 0.0
    %452 = vmatprep.subr.mxu0 0.0
    %453 = vmatpush1.msra.mxu0 0.0
    %454 = vmatprep.subr.mxu0 0.0
    %455 = vmatpush1.msra.mxu0 %v143
    %456 = vmatprep.subr.mxu0 0.0
    %457 = vmatpush1.msra.mxu0 %v142
    %458 = vmatprep.subr.mxu0 0.0
    %459 = vmatpush2.msra.mxu0 0.0
    %460 = vmatprep.subr.mxu0 0.0
    %461 = vmatpush2.msra.mxu0 0.0
    %462 = vmatprep.subr.mxu0 0.0
    %463 = vmatpush2.msra.mxu0 0.0
    %464 = vmatprep.subr.mxu0 0.0
    %465 = vmatpush2.msra.mxu0 0.0
    %466 = vmatprep.subr.mxu0 0.0
    %467 = vmatpush2.msra.mxu0 0.0
    %468 = vmatprep.subr.mxu0 0.0
    %469 = vmatpush2.msra.mxu0 0.0
    %470 = vmatprep.subr.mxu0 0.0
    %471 = vmatpush2.msra.mxu0 0.0
    %472 = vmatprep.subr.mxu0 0.0
    %473 = vmatpush2.msra.mxu0 0.0
    %474 = vmatprep.subr.mxu0 0.0
    %475 = vmatpush2.msra.mxu0 0.0
    %476 = vmatprep.subr.mxu0 0.0
    %477 = vmatpush2.msra.mxu0 0.0
    %478 = vmatprep.subr.mxu0 0.0
    %479 = vmatpush2.msra.mxu0 0.0
    %480 = vmatprep.subr.mxu0 0.0
    %481 = vmatpush2.msra.mxu0 0.0
    %482 = vmatprep.subr.mxu0 0.0
    %483 = vmatpush2.msra.mxu0 0.0
    %484 = vmatprep.subr.mxu0 0.0
    %485 = vmatpush2.msra.mxu0 0.0
    %486 = vmatprep.subr.mxu0 0.0
    %487 = vmatpush2.msra.mxu0 0.0
    %488 = vmatprep.subr.mxu0 0.0
    %489 = vmatpush2.msra.mxu0 0.0
    %490 = vmatprep.mubr.f32.mxu0 0.0
    %491 = vmatmul.mubr.f32.gmra.mxu0 %v424
    %v492 = vpop.f32.mrf.mxu0
    %v493 = vadd.f32 %v420, %v492
    %v494 = vpop.f32.mrf.mxu0
    %495 = vdwg.mxu0
    %v496 = vlaneseq
    %v497 = vshrl.u32 %v496, 7
    %v498 = vsub.s32 0, %v497
    %v499 = vrot.slane %v178, %v498
    %v500 = vadd.f32 %v493, %v499
    %v501 = vmax.f32 %v500, 0.0
    %v502 = vlaneseq
    %v503 = vshrl.u32 %v502, 7
    %v504 = vsub.s32 0, %v503
    %v505 = vrot.slane %v179, %v504
    %506 = vmatprep.subr.mxu0 0.0
    %507 = vmatpush1.msra.mxu0 %v175
    %508 = vmatprep.subr.mxu0 0.0
    %509 = vmatpush1.msra.mxu0 %v174
    %510 = vmatprep.subr.mxu0 0.0
    %511 = vmatpush1.msra.mxu0 %v173
    %512 = vmatprep.subr.mxu0 0.0
    %513 = vmatpush1.msra.mxu0 %v172
    %514 = vmatprep.subr.mxu0 0.0
    %515 = vmatpush1.msra.mxu0 %v171
    %516 = vmatprep.subr.mxu0 0.0
    %517 = vmatpush1.msra.mxu0 %v170
    %518 = vmatprep.subr.mxu0 0.0
    %519 = vmatpush1.msra.mxu0 %v169
    %520 = vmatprep.subr.mxu0 0.0
    %521 = vmatpush1.msra.mxu0 %v168
    %522 = vmatprep.subr.mxu0 0.0
    %523 = vmatpush1.msra.mxu0 %v167
    %524 = vmatprep.subr.mxu0 0.0
    %525 = vmatpush1.msra.mxu0 %v166
    %526 = vmatprep.subr.mxu0 0.0
    %527 = vmatpush1.msra.mxu0 %v165
    %528 = vmatprep.subr.mxu0 0.0
    %529 = vmatpush1.msra.mxu0 %v164
    %530 = vmatprep.subr.mxu0 0.0
    %531 = vmatpush1.msra.mxu0 %v163
    %532 = vmatprep.subr.mxu0 0.0
    %533 = vmatpush1.msra.mxu0 %v162
    %534 = vmatprep.subr.mxu0 0.0
    %535 = vmatpush1.msra.mxu0 %v161
    %536 = vmatprep.subr.mxu0 0.0
    %537 = vmatpush1.msra.mxu0 %v160
    %538 = vmatprep.subr.mxu0 0.0
    %539 = vmatpush2.msra.mxu0 0.0
    %540 = vmatprep.subr.mxu0 0.0
    %541 = vmatpush2.msra.mxu0 0.0
    %542 = vmatprep.subr.mxu0 0.0
    %543 = vmatpush2.msra.mxu0 0.0
    %544 = vmatprep.subr.mxu0 0.0
    %545 = vmatpush2.msra.mxu0 0.0
    %546 = vmatprep.subr.mxu0 0.0
    %547 = vmatpush2.msra.mxu0 0.0
    %548 = vmatprep.subr.mxu0 0.0
    %549 = vmatpush2.msra.mxu0 0.0
    %550 = vmatprep.subr.mxu0 0.0
    %551 = vmatpush2.msra.mxu0 0.0
    %552 = vmatprep.subr.mxu0 0.0
    %553 = vmatpush2.msra.mxu0 0.0
    %554 = vmatprep.subr.mxu0 0.0
    %555 = vmatpush2.msra.mxu0 0.0
    %556 = vmatprep.subr.mxu0 0.0
    %557 = vmatpush2.msra.mxu0 0.0
    %558 = vmatprep.subr.mxu0 0.0
    %559 = vmatpush2.msra.mxu0 0.0
    %560 = vmatprep.subr.mxu0 0.0
    %561 = vmatpush2.msra.mxu0 0.0
    %562 = vmatprep.subr.mxu0 0.0
    %563 = vmatpush2.msra.mxu0 0.0
    %564 = vmatprep.subr.mxu0 0.0
    %565 = vmatpush2.msra.mxu0 0.0
    %566 = vmatprep.subr.mxu0 0.0
    %567 = vmatpush2.msra.mxu0 0.0
    %568 = vmatprep.subr.mxu0 0.0
    %569 = vmatpush2.msra.mxu0 0.0
    %570 = vmatprep.mubr.f32.mxu0 0.0
    %571 = vmatmul.mubr.f32.gmra.mxu0 %v501
    %v572 = vpop.f32.mrf.mxu0
    %v573 = vadd.f32 %v505, %v572
    %v574 = vpop.f32.mrf.mxu0
    %575 = vdwg.mxu0
    %v576 = vmul.f32 %v573, 1.442695
    %v577 = vpow.pop %v576
    %579 = vrot.lane.b32.xlu0 %v59, 8
    %v580 = vpop.permute.xlu0 %579
    %v582 = vmul.f32 %v577, %v580
    %584 = vrot.lane.b32.xlu0 %v582, 120
    %v585 = vpop.permute.xlu0 %584
    %v587 = vadd.f32 %v573, %v585
    %588 = vst.msk [vmem:[%s5] sm:$0xff] %vm341, %v352
    %590 = vrot.lane.b32.xlu0 %v573, 16
    %v591 = vpop.permute.xlu0 %590
    %vm593 = vcmask 195712
    %594 = vst.msk [vmem:[%s5] sm:$0xff] %vm593, %v591
    %596 = vrot.lane.b32.xlu0 %v577, 16
    %v597 = vpop.permute.xlu0 %596
    %vm599 = vcmask 261312
    %600 = vst.msk [vmem:[%s5] sm:$0xff] %vm599, %v597
    %602 = vrot.lane.b32.xlu0 %v587, 32
    %v603 = vpop.permute.xlu0 %602
    %vm605 = vcmask 326912
    %606 = vst.msk [vmem:[%s5] sm:$0xff] %vm605, %v603
    // Predicated region
    $region34: #{encoder_forward.1} parent=1 // pred_check
      _
    $region35: #{encoder_forward.1} parent=1 // pred_check_branch
      %608 = sbr.rel (0) target = $region37
    $region36: #{encoder_forward.1} parent=1 // pred_region
      _
    $region37: #{encoder_forward.1} parent=1 // pred_fallthru
      _
    // Predicated region
    $region38: #{encoder_forward.1} parent=1 // pred_check
      _
    $region39: #{encoder_forward.1} parent=1 // pred_check_branch
      %610 = sbr.rel (0) target = $region41
    $region40: #{encoder_forward.1} parent=1 // pred_region
      _
    $region41: #{encoder_forward.1} parent=1 // pred_fallthru
      _
    %611 = vsyncpa [#allocation3], 1
    %612 = vsyncpa [#allocation5], 1

</llo_original>
